<compile_context>
chip_gen: v7x
topology: tpu7x:2x2x1
jax: 0.10.0
libtpu: 0.0.40
codegen_flags: <defaults>
</compile_context>

<pallas_src>
import functools
import math

import jax
import jax.numpy as jnp
from jax.experimental import pallas as pl
from jax.experimental.pallas import tpu as pltpu


def _graph_attention_kernel(x_ref, w_ref, out_ref, *, n_nodes, slabs, d_k):
    """One grid step = `slabs` consecutive (b, l) graphs.

    x_ref:   (slabs * N, D)   activations for this tile (f32)
    w_ref:   (D, 2 * d_k)     packed [Wq / sqrt(d_k) | Wk], bf16 (resident)
    out_ref: (slabs, N, N)    attention for this tile (f32)
    """
    n = n_nodes

    # Single fused projection: x goes through the MXU once, f32 accumulate.
    x = x_ref[...].astype(jnp.bfloat16)                                # one cast pass over x
    qk = jnp.dot(x, w_ref[...], preferred_element_type=jnp.float32)    # (slabs*N, 2*d_k)

    # One cast pass over packed q/k, then expose the slab (batch) dim and split
    # the halves.  The reshape only splits the sublane dim at a multiple of the
    # native tile (N = 16), so no cross-lane relayout is needed.
    qk = qk.astype(jnp.bfloat16).reshape(slabs, n, 2 * d_k)
    q = qk[..., :d_k]            # 1/sqrt(d_k) already folded into this half
    k = qk[..., d_k:]

    # Batched score matmul: contract d_k, batch over slabs -> f32 logits.
    s = jnp.einsum("snk,smk->snm", q, k,
                   preferred_element_type=jnp.float32)                 # (slabs, N, N)

    # Numerically stable softmax, all in f32; reciprocal uses the EUP slot.
    m = jnp.max(s, axis=-1, keepdims=True)
    e = jnp.exp(s - m)
    denom = jnp.sum(e, axis=-1, keepdims=True)
    attn = e * pl.reciprocal(denom, approx=True)

    # TODO(synk): repack the output lane-dense as (BL, N*N) (N=16 < 128 lanes
    # means masked vst here) once the (slabs, N, N) -> (slabs, N*N) in-kernel
    # relayout is verified to lower on all target Mosaic versions.
    out_ref[...] = attn.astype(out_ref.dtype)


def _choose_slabs_per_tile(bl, n, d, *, max_tile_bytes=2 << 20, max_rows=1024):
    """Pick slabs per grid step: big enough to amortize per-step overhead and
    hit the HBM roofline, small enough that the double-buffered x block stays
    well inside v7x's 64 MiB VMEM (32 MiB default scoped limit)."""
    row_cap = max(n, min(max_rows, max_tile_bytes // max(1, d * 4)))
    best = 1
    for s in range(1, bl + 1):
        if bl % s == 0 and s * n <= row_cap:
            best = s
    # Prefer >= 2 grid steps when possible: enables software pipelining and
    # shards the grid across both v7x TensorCores.
    if bl // best < 2:
        for s in range(best - 1, 0, -1):
            if bl % s == 0:
                best = s
                break
    return best


def graph_attention(x, wq, wk):
    """
    x:  [B, L, N, d_model]  float32
    wq: [d_model, d_k]      (transposed nn.Linear weight)
    wk: [d_model, d_k]
    returns attn: [B, L, N, N] float32
    """
    B, L, N, D = x.shape
    d_k = wq.shape[1]
    BL = B * L
    scale = 1.0 / math.sqrt(d_k)

    # Pack [Wq * scale | Wk] once (f32 math, stored bf16): one projection
    # matmul in the kernel, scale folded into the Q half for free.
    w_packed = jnp.concatenate([wq * scale, wk], axis=1).astype(jnp.bfloat16)

    slabs = _choose_slabs_per_tile(BL, N, D)
    tile_rows = slabs * N
    grid = (BL // slabs,)

    x2 = x.reshape(BL * N, D)

    kernel = functools.partial(
        _graph_attention_kernel, n_nodes=N, slabs=slabs, d_k=d_k)

    # Advisory cost estimate for XLA scheduling around the custom call.
    flops = BL * (2 * N * D * (2 * d_k) + 2 * N * N * d_k)
    cost = pl.CostEstimate(
        flops=flops,
        transcendentals=BL * N * N + BL * N,
        bytes_accessed=x2.size * 4 + w_packed.size * 2 + BL * N * N * 4,
    )

    out = pl.pallas_call(
        kernel,
        out_shape=jax.ShapeDtypeStruct((BL, N, N), jnp.float32),
        grid_spec=pltpu.PrefetchScalarGridSpec(
            num_scalar_prefetch=0,
            grid=grid,
            in_specs=[
                pl.BlockSpec((tile_rows, D), lambda i: (i, 0)),
                # Constant index_map -> weights stay resident across all steps.
                pl.BlockSpec((D, 2 * d_k), lambda i: (0, 0)),
            ],
            out_specs=pl.BlockSpec((slabs, N, N), lambda i: (i, 0, 0)),
        ),
        compiler_params=pltpu.CompilerParams(
            dimension_semantics=("parallel",),
        ),
        cost_estimate=cost,
    )(x2, w_packed)

    return out.reshape(B, L, N, N)


def graph_attention_ref(x, wq, wk):
    d_k = wq.shape[1]
    q = jnp.einsum("blnd,dk->blnk", x, wq)
    k = jnp.einsum("blnd,dk->blnk", x, wk)
    scores = jnp.einsum("blnk,blmk->blnm", q, k) / jnp.sqrt(jnp.float32(d_k))
    return jax.nn.softmax(scores, axis=-1)


if __name__ == "__main__":
    # Small shapes consistent with the module's forward:
    # x: [batch_size, len_q, nodes_number, d_model]
    B, L, N, d_model, d_k = 2, 4, 16, 32, 16

    key = jax.random.PRNGKey(0)
    kx, kq, kk = jax.random.split(key, 3)

    x = jax.random.normal(kx, (B, L, N, d_model), dtype=jnp.float32)
    # Deterministic init mimicking nn.Linear uniform(-1/sqrt(d_model), 1/sqrt(d_model)),
    # stored already-transposed as [d_model, d_k].
    bound = 1.0 / math.sqrt(d_model)
    wq = jax.random.uniform(kq, (d_model, d_k), jnp.float32, -bound, bound)
    wk = jax.random.uniform(kk, (d_model, d_k), jnp.float32, -bound, bound)

    attn = graph_attention(x, wq, wk)
    attn = jax.block_until_ready(attn)

    ref = graph_attention_ref(x, wq, wk)
    assert attn.shape == (B, L, N, N)
    # bf16 MXU operands + approx reciprocal: relaxed (but still tight) tolerance.
    assert jnp.allclose(attn, ref, atol=2e-2, rtol=2e-2), "mismatch vs reference"
    # Rows of a softmax must sum to 1 (approx reciprocal -> ~1e-3 slack).
    assert jnp.allclose(jnp.sum(attn, axis=-1), 1.0, atol=1e-2), "rows do not sum to 1"

    print("KERNEL_OK")
</pallas_src>

<mosaic_0001>
module attributes {stable_mosaic.version = 11 : i64} {
  func.func @_graph_attention_kernel(%arg0: i32, %arg1: memref<64x32xf32, #tpu.memory_space<vmem>>, %arg2: memref<32x32xbf16, #tpu.memory_space<vmem>>, %arg3: memref<4x16x16xf32, #tpu.memory_space<vmem>>) attributes {dimension_semantics = [#tpu.dimension_semantics<parallel>], iteration_bounds = array<i64: 2>, scalar_prefetch = 0 : i64, scratch_operands = 0 : i64, tpu.core_type = #tpu.core_type<tc>, window_params = [{transform_indices = @transform_0, window_bounds = array<i64: 64, 32>}, {pipeline_mode = #tpu.pipeline_mode<synchronous>, transform_indices = @transform_1, window_bounds = array<i64: 32, 32>}, {transform_indices = @transform_2, window_bounds = array<i64: 4, 16, 16>}]} {
    %c0 = arith.constant 0 : index
    %c0_0 = arith.constant 0 : index
    %0 = vector.load %arg1[%c0, %c0_0] : memref<64x32xf32, #tpu.memory_space<vmem>>, vector<64x32xf32>
    %1 = arith.truncf %0 : vector<64x32xf32> to vector<64x32xbf16>
    %c0_1 = arith.constant 0 : index
    %c0_2 = arith.constant 0 : index
    %2 = vector.load %arg2[%c0_1, %c0_2] : memref<32x32xbf16, #tpu.memory_space<vmem>>, vector<32x32xbf16>
    %cst = arith.constant dense<0.000000e+00> : vector<64x32xf32>
    %3 = tpu.matmul %1, %2, %cst {dimension_numbers = #tpu.dot_dimension_numbers<[1], [0], [0], [1], [0, 0, 1, 1], [], []>} : vector<64x32xbf16>, vector<32x32xbf16>, vector<64x32xf32> -> vector<64x32xf32>
    %4 = arith.truncf %3 : vector<64x32xf32> to vector<64x32xbf16>
    %5 = vector.shape_cast %4 : vector<64x32xbf16> to vector<4x16x32xbf16>
    %6 = vector.extract_strided_slice %5 {offsets = [0, 0, 0], sizes = [4, 16, 16], strides = [1, 1, 1]} : vector<4x16x32xbf16> to vector<4x16x16xbf16>
    %7 = vector.extract_strided_slice %5 {offsets = [0, 0, 16], sizes = [4, 16, 16], strides = [1, 1, 1]} : vector<4x16x32xbf16> to vector<4x16x16xbf16>
    "tpu.trace_start"() <{level = 10 : i32, message = "snk,smk->snm"}> : () -> ()
    %cst_3 = arith.constant dense<0.000000e+00> : vector<4x16x16xf32>
    %8 = tpu.matmul %6, %7, %cst_3 {dimension_numbers = #tpu.dot_dimension_numbers<[2], [2], [1], [1], [0, 0, 0, 1, 1, 1], [0], [0]>} : vector<4x16x16xbf16>, vector<4x16x16xbf16>, vector<4x16x16xf32> -> vector<4x16x16xf32>
    "tpu.trace_stop"() : () -> ()
    %cst_4 = arith.constant dense<0xFF800000> : vector<4x16xf32>
    %9 = vector.multi_reduction <maximumf>, %8, %cst_4 [2] : vector<4x16x16xf32> to vector<4x16xf32>
    %10 = vector.shape_cast %9 : vector<4x16xf32> to vector<4x16x1xf32>
    %11 = vector.broadcast %10 : vector<4x16x1xf32> to vector<4x16x16xf32>
    %12 = arith.subf %8, %11 : vector<4x16x16xf32>
    %13 = math.exp %12 : vector<4x16x16xf32>
    %cst_5 = arith.constant dense<0.000000e+00> : vector<4x16xf32>
    %14 = vector.multi_reduction <add>, %13, %cst_5 [2] : vector<4x16x16xf32> to vector<4x16xf32>
    %15 = vector.shape_cast %14 : vector<4x16xf32> to vector<4x16x1xf32>
    %16 = tpu.reciprocal %15 {approx = true} : vector<4x16x1xf32> -> vector<4x16x1xf32>
    %17 = vector.broadcast %16 : vector<4x16x1xf32> to vector<4x16x16xf32>
    %18 = arith.mulf %13, %17 : vector<4x16x16xf32>
    %c0_6 = arith.constant 0 : index
    %c0_7 = arith.constant 0 : index
    %c0_8 = arith.constant 0 : index
    %19 = vector.load %arg3[%c0_6, %c0_7, %c0_8] : memref<4x16x16xf32, #tpu.memory_space<vmem>>, vector<4x16x16xf32>
    tpu.vector_store %arg3[%c0_6, %c0_7, %c0_8], %18 {strides = array<i32>} : memref<4x16x16xf32, #tpu.memory_space<vmem>>, vector<4x16x16xf32>,
    return
  }
  func.func @transform_0(%arg0: i32) -> (i32, i32) {
    %c0_i32 = arith.constant 0 : i32
    %c0_i32_0 = arith.constant 0 : i32
    return %arg0, %c0_i32 : i32, i32
  }
  func.func @transform_1(%arg0: i32) -> (i32, i32) {
    %c0_i32 = arith.constant 0 : i32
    %c0_i32_0 = arith.constant 0 : i32
    %c0_i32_1 = arith.constant 0 : i32
    return %c0_i32, %c0_i32_0 : i32, i32
  }
  func.func @transform_2(%arg0: i32) -> (i32, i32, i32) {
    %c0_i32 = arith.constant 0 : i32
    %c0_i32_0 = arith.constant 0 : i32
    %c0_i32_1 = arith.constant 0 : i32
    return %arg0, %c0_i32, %c0_i32_0 : i32, i32, i32
  }
}

</mosaic_0001>

<llo_original>
// kernel: tpu_custom_call.1
$region0: #{tpu_custom_call.1}
  #allocation0 [shape = 'u32[]', space=smem, size = 0x4, offset = 0x4, fixed_abs, tag = 'smem constant byte address 0x4 - core index']
  #allocation1 [shape = 'u32[144,128]{1,0:T(1,128)}', space=vmem, size = 0x12000, scoped, tag = 'internal scratch']
  %s0 = inlined_call_operand.vmem [shape: f32[128,32], index: 0, kind: input, shape index: {}]
  %s1 = inlined_call_operand.vmem [shape: bf16[32,32], index: 1, kind: input, shape index: {}]
  %s2 = inlined_call_operand.hbm [shape: f32[8,16,16], index: 2, kind: output, shape index: {}]
  %s3 = sld [smem:[#allocation0]]
  $region41: #{tpu_custom_call.1} parent=0
    _
  %s5 = ssub.s32 1, %s3
  %s6 = scalar_select 0, %s5, %s3
  $region1: #{tpu_custom_call.1} parent=0
    #allocation2 [shape = 'u8[65536]{0}', space=vmem, size = 0x10000, scoped, tag = 'output window, operand 0']
    #allocation3 [shape = 's32[2]{0}', space=sflag, size = 0x8, scoped, tag = 'scoped memory for tpu_custom_call.1']
    %7 = vsyncpa [#allocation3], 0
    %s8 = scalar_lea.sflag [#allocation3], 1
    %9 = vsyncpa %s8, 0
    loop: start=0, step=1, limit=4
    $region2: #{tpu_custom_call.1} parent=1 // loop_pre_header
      _
    $region3: #{tpu_custom_call.1} parent=1 // loop_header
      %s11 = sphi 0, %s15
      %p12 = scmp.ge.s32.totalorder %s11, 4
      %s21 = sphi 0, %s23
      %s24 = sphi 0, %s21
      %s25 = sphi 0, %s24
      %s41 = sphi 0, %s25
      %s45 = sphi 0, %s45
      %s47 = sphi 0, %s45
      %s48 = sphi 0, %s47
      %s62 = sphi 0, %s48
      %s68 = sphi 0, %s70
      %s71 = sphi 0, %s68
      %s72 = sphi 0, %s71
      %s88 = sphi 0, %s72
    $region4: #{tpu_custom_call.1} parent=1 // loop_header_branch
      %14 = sbr.rel (%p12) target = $region8
    $region5: #{tpu_custom_call.1} parent=1 // loop_body
      %s16 = ssub.s32 %s11, 1
      %s17 = ssub.s32 %s11, 2
      %s18 = sadd.s32 %s11, 1
      %s19 = ssub.s32 %s11, %s18
      %p20 = scmp.eq.s32.totalorder %s19, 0
      %s22 = sadd.s32 %s21, 1
      %s23 = scalar_select %p20, %s21, %s22
      %p26 = pneg %p20
      %p27 = scmp.eq.s32.totalorder %s11, 1
      %p28 = por %p26, %p27
      %p29 = scmp.ne.s32.totalorder %s21, %s24
      %p30 = scmp.eq.s32.totalorder %s11, 0
      %p31 = por %p29, %p30
      %p32 = scmp.ne.s32.totalorder %s21, %s24
      %p33 = scmp.eq.s32.totalorder %s16, 1
      %p34 = por %p32, %p33
      %p35 = scmp.ne.s32.totalorder %s24, %s25
      %p36 = scmp.eq.s32.totalorder %s16, 0
      %p37 = por %p35, %p36
      %p38 = scmp.ne.s32.totalorder %s24, %s25
      %p39 = scmp.eq.s32.totalorder %s17, 1
      %p40 = por %p38, %p39
      %p42 = scmp.ne.s32.totalorder %s25, %s41
      %p43 = scmp.eq.s32.totalorder %s17, 0
      %p44 = por %p42, %p43
      %s46 = sadd.s32 %s45, 1
      %p49 = scmp.eq.s32.totalorder %s11, 1
      %p50 = scmp.ne.s32.totalorder %s45, %s47
      %p51 = scmp.eq.s32.totalorder %s11, 0
      %p52 = por %p50, %p51
      %p53 = scmp.ne.s32.totalorder %s45, %s47
      %p54 = scmp.eq.s32.totalorder %s16, 1
      %p55 = por %p53, %p54
      %p56 = scmp.ne.s32.totalorder %s47, %s48
      %p57 = scmp.eq.s32.totalorder %s16, 0
      %p58 = por %p56, %p57
      %p59 = scmp.ne.s32.totalorder %s47, %s48
      %p60 = scmp.eq.s32.totalorder %s17, 1
      %p61 = por %p59, %p60
      %p63 = scmp.ne.s32.totalorder %s48, %s62
      %p64 = scmp.eq.s32.totalorder %s17, 0
      %p65 = por %p63, %p64
      %s66 = ssub.s32 %s11, %s18
      %p67 = scmp.eq.s32.totalorder %s66, 0
      %s69 = sadd.s32 %s68, 1
      %s70 = scalar_select %p67, %s68, %s69
      %p73 = pneg %p67
      %p74 = scmp.eq.s32.totalorder %s11, 1
      %p75 = por %p73, %p74
      %p76 = scmp.ne.s32.totalorder %s68, %s71
      %p77 = scmp.eq.s32.totalorder %s11, 0
      %p78 = por %p76, %p77
      %p79 = scmp.ne.s32.totalorder %s68, %s71
      %p80 = scmp.eq.s32.totalorder %s16, 1
      %p81 = por %p79, %p80
      %p82 = scmp.ne.s32.totalorder %s71, %s72
      %p83 = scmp.eq.s32.totalorder %s16, 0
      %p84 = por %p82, %p83
      %p85 = scmp.ne.s32.totalorder %s71, %s72
      %p86 = scmp.eq.s32.totalorder %s17, 1
      %p87 = por %p85, %p86
      %p89 = scmp.ne.s32.totalorder %s72, %s88
      %p90 = scmp.eq.s32.totalorder %s17, 0
      %p91 = por %p89, %p90
      %p92 = scmp.le.s32.totalorder 1, %s11
      %p93 = scmp.lt.s32.totalorder %s11, 3
      %p94 = pnand %p92, %p93
      %p95 = pneg %p94
      // Predicated region
      $region9: #{tpu_custom_call.1} parent=5 // pred_check
        _
      $region10: #{tpu_custom_call.1} parent=5 // pred_check_branch
        %97 = sbr.rel (%p94) target = $region12
      $region11: #{tpu_custom_call.1} parent=5 // pred_region
        %s98 = ssub.s32 %s11, 1
        // Predicated region
        $region13: #{tpu_custom_call.1} parent=11 // pred_check
          %p99 = pneg %p58
        $region14: #{tpu_custom_call.1} parent=11 // pred_check_branch
          %101 = sbr.rel (%p99) target = $region16
        $region15: #{tpu_custom_call.1} parent=11 // pred_region
          _
        $region16: #{tpu_custom_call.1} parent=11 // pred_fallthru
          _
      $region12: #{tpu_custom_call.1} parent=5 // pred_fallthru
        _
      %p102 = scmp.lt.s32.totalorder %s11, 2
      // Predicated region
      $region17: #{tpu_custom_call.1} parent=5 // pred_check
        %p103 = pneg %p102
      $region18: #{tpu_custom_call.1} parent=5 // pred_check_branch
        %105 = sbr.rel (%p103) target = $region20
      $region19: #{tpu_custom_call.1} parent=5 // pred_region
        // Predicated region
        $region21: #{tpu_custom_call.1} parent=19 // pred_check
          %p106 = pneg %p31
        $region22: #{tpu_custom_call.1} parent=19 // pred_check_branch
          %108 = sbr.rel (%p106) target = $region24
        $region23: #{tpu_custom_call.1} parent=19 // pred_region
          %s109 = smul.u32 8, %s11
          %p110 = scmp.lt.s32.totalorder %s109, 15
          %s111 = scalar_select %p110, %s109, 15
          %s112 = smul.addr %s111, 8
          %s113 = scalar_lea.vmem %s0, %s112
          %s114 = smul.u32 8, %s11
        $region24: #{tpu_custom_call.1} parent=19 // pred_fallthru
          _
      $region20: #{tpu_custom_call.1} parent=5 // pred_fallthru
        _
      %p115 = scmp.le.s32.totalorder 1, %s11
      %p116 = scmp.lt.s32.totalorder %s11, 3
      %p117 = pnand %p115, %p116
      %p118 = pneg %p117
      // Predicated region
      $region25: #{tpu_custom_call.1} parent=5 // pred_check
        _
      $region26: #{tpu_custom_call.1} parent=5 // pred_check_branch
        %120 = sbr.rel (%p117) target = $region28
      $region27: #{tpu_custom_call.1} parent=5 // pred_region
        %s121 = ssub.s32 %s11, 1
        %s122 = smul.u32 8, %s16
        %p123 = scmp.lt.s32.totalorder %s122, 15
        %s124 = scalar_select %p123, %s122, 15
        %s125 = smul.addr %s124, 8
        %s126 = scalar_lea.vmem %s0, %s125
        %p127 = pneg %p37
        %p128 = pneg %p34
        %p129 = pneg %p58
        %p130 = pneg %p55
        %p131 = pneg %p84
        %p132 = pneg %p81
        %s133 = sand.u32 %s71, 1
        %s134 = scalar_lea.sflag [#allocation3], %s133
        %s135 = sand.u32 %s71, 1
        %s136 = smul.addr %s135, 64
        %s137 = scalar_lea.vmem [#allocation2], %s136
        %s138 = smul.u32 8, %s16
        %p139 = scmp.lt.s32.totalorder %s138, 15
        %s140 = scalar_select %p139, %s138, 15
        %s141 = smul.addr %s140, 8
        %s142 = scalar_lea.vmem %s0, %s141
        %s143 = smul.u32 8, %s16
        %s144 = smul.u32 4, %s16
        %v146 = vld [vmem:[%s142] sm:$0xff]
        %v147 = vld [vmem:[%s142 + $0x8] sm:$0xff]
        %v148 = vld [vmem:[%s142 + $0x10] sm:$0xff]
        %v149 = vld [vmem:[%s142 + $0x18] sm:$0xff]
        %v150 = vld [vmem:[%s142 + $0x20] sm:$0xff]
        %v151 = vld [vmem:[%s142 + $0x28] sm:$0xff]
        %v152 = vld [vmem:[%s142 + $0x30] sm:$0xff]
        %v153 = vld [vmem:[%s142 + $0x38] sm:$0xff]
        %v154 = vpack.c.bf16 %v147, %v146
        %v155 = vpack.c.bf16 %v149, %v148
        %v156 = vpack.c.bf16 %v151, %v150
        %v157 = vpack.c.bf16 %v153, %v152
        %v158 = vld [vmem:[%s1] sm:$0xf]
        %v159 = vld [vmem:[%s1 + $0x4] sm:$0xf]
        %v160 = vld [vmem:[%s1 + $0x8] sm:$0xf]
        %v161 = vld [vmem:[%s1 + $0xc] sm:$0xf]
        %v166 = vunpack.c.l.b16 %v158
        %v167 = vunpack.c.l.b16 %v159
        %v168 = vunpack.c.l.b16 %v160
        %v169 = vunpack.c.l.b16 %v161
        %v170 = vpack.c.b16 %v167, %v166
        %v171 = vpack.c.b16 %v169, %v168
        %vm174 = vcmask 261120
        %v176 = vsel %vm174, %v154, 0
        %v179 = vsel %vm174, %v155, 0
        %v182 = vsel %vm174, %v156, 0
        %v185 = vsel %vm174, %v157, 0
        %187 = vmatprep.subr.bf16.mxu0 0
        %188 = vmatpush1.bf16.msra.mxu0 %v170
        %189 = vmatprep.subr.bf16.mxu0 0
        %190 = vmatpush1.bf16.msra.mxu0 %v171
        %191 = vmatprep.subr.bf16.mxu0 0
        %192 = vmatpush1.bf16.msra.mxu0 0
        %193 = vmatprep.subr.bf16.mxu0 0
        %194 = vmatpush1.bf16.msra.mxu0 0
        %195 = vmatprep.subr.bf16.mxu0 0
        %196 = vmatpush1.bf16.msra.mxu0 0
        %197 = vmatprep.subr.bf16.mxu0 0
        %198 = vmatpush1.bf16.msra.mxu0 0
        %199 = vmatprep.subr.bf16.mxu0 0
        %200 = vmatpush1.bf16.msra.mxu0 0
        %201 = vmatprep.subr.bf16.mxu0 0
        %202 = vmatpush1.bf16.msra.mxu0 0
        %203 = vmatprep.subr.bf16.mxu0 0
        %204 = vmatpush1.bf16.msra.mxu0 0
        %205 = vmatprep.subr.bf16.mxu0 0
        %206 = vmatpush1.bf16.msra.mxu0 0
        %207 = vmatprep.subr.bf16.mxu0 0
        %208 = vmatpush1.bf16.msra.mxu0 0
        %209 = vmatprep.subr.bf16.mxu0 0
        %210 = vmatpush1.bf16.msra.mxu0 0
        %211 = vmatprep.subr.bf16.mxu0 0
        %212 = vmatpush1.bf16.msra.mxu0 0
        %213 = vmatprep.subr.bf16.mxu0 0
        %214 = vmatpush1.bf16.msra.mxu0 0
        %215 = vmatprep.subr.bf16.mxu0 0
        %216 = vmatpush1.bf16.msra.mxu0 0
        %217 = vmatprep.subr.bf16.mxu0 0
        %218 = vmatpush1.bf16.msra.mxu0 0
        %219 = vmatprep.mubr.bf16.mxu0 0
        %220 = vmatmul.mubr.bf16.gmra.mrb[0].mxu0 %v176
        %v221 = vpop.f32.mrb[0].mxu0
        %v222 = vadd.f32 0.0, %v221
        %v223 = vpop.f32.mrb[0].mxu0
        %v224 = vpop.f32.mrb[0].mxu0
        %v225 = vadd.f32 0.0, %v224
        %v226 = vpop.f32.mrb[0].mxu0
        %227 = vmatprep.mubr.bf16.mxu0 0
        %228 = vmatmul.mubr.bf16.gmra.mrb[0].mxu0 %v179
        %v229 = vpop.f32.mrb[0].mxu0
        %v230 = vadd.f32 0.0, %v229
        %v231 = vpop.f32.mrb[0].mxu0
        %v232 = vpop.f32.mrb[0].mxu0
        %v233 = vadd.f32 0.0, %v232
        %v234 = vpop.f32.mrb[0].mxu0
        %235 = vmatprep.mubr.bf16.mxu0 0
        %236 = vmatmul.mubr.bf16.gmra.mrb[0].mxu0 %v182
        %v237 = vpop.f32.mrb[0].mxu0
        %v238 = vadd.f32 0.0, %v237
        %v239 = vpop.f32.mrb[0].mxu0
        %v240 = vpop.f32.mrb[0].mxu0
        %v241 = vadd.f32 0.0, %v240
        %v242 = vpop.f32.mrb[0].mxu0
        %243 = vmatprep.mubr.bf16.mxu0 0
        %244 = vmatmul.mubr.bf16.gmra.mrb[0].mxu0 %v185
        %v245 = vpop.f32.mrb[0].mxu0
        %v246 = vadd.f32 0.0, %v245
        %v247 = vpop.f32.mrb[0].mxu0
        %v248 = vpop.f32.mrb[0].mxu0
        %v249 = vadd.f32 0.0, %v248
        %v250 = vpop.f32.mrb[0].mxu0
        %251 = vdwg.mxu0
        %v252 = vpack.c.bf16 %v225, %v222
        %v253 = vpack.c.bf16 %v233, %v230
        %v254 = vpack.c.bf16 %v241, %v238
        %v255 = vpack.c.bf16 %v249, %v246
        %257 = vrot.lane.b32.xlu0 %v252, 112
        %v258 = vpop.permute.xlu0 %257
        %vm259 = vcmask 130048
        %v261 = vsel %vm259, %v252, 0
        %v264 = vsel %vm259, %v258, 0
        %266 = vmatprep.subr.bf16.mxu0 0
        %267 = vmatpush1.bf16.xpose.msra.mxu0 %v264
        %268 = vmatprep.subr.bf16.mxu0 0
        %269 = vmatpush1.bf16.xpose.msra.mxu0 0
        %270 = vmatprep.subr.bf16.mxu0 0
        %271 = vmatpush1.bf16.xpose.msra.mxu0 0
        %272 = vmatprep.subr.bf16.mxu0 0
        %273 = vmatpush1.bf16.xpose.msra.mxu0 0
        %274 = vmatprep.subr.bf16.mxu0 0
        %275 = vmatpush1.bf16.xpose.msra.mxu0 0
        %276 = vmatprep.subr.bf16.mxu0 0
        %277 = vmatpush1.bf16.xpose.msra.mxu0 0
        %278 = vmatprep.subr.bf16.mxu0 0
        %279 = vmatpush1.bf16.xpose.msra.mxu0 0
        %280 = vmatprep.subr.bf16.mxu0 0
        %281 = vmatpush1.bf16.xpose.msra.mxu0 0
        %282 = vmatprep.subr.bf16.mxu0 0
        %283 = vmatpush1.bf16.xpose.msra.mxu0 0
        %284 = vmatprep.subr.bf16.mxu0 0
        %285 = vmatpush1.bf16.xpose.msra.mxu0 0
        %286 = vmatprep.subr.bf16.mxu0 0
        %287 = vmatpush1.bf16.xpose.msra.mxu0 0
        %288 = vmatprep.subr.bf16.mxu0 0
        %289 = vmatpush1.bf16.xpose.msra.mxu0 0
        %290 = vmatprep.subr.bf16.mxu0 0
        %291 = vmatpush1.bf16.xpose.msra.mxu0 0
        %292 = vmatprep.subr.bf16.mxu0 0
        %293 = vmatpush1.bf16.xpose.msra.mxu0 0
        %294 = vmatprep.subr.bf16.mxu0 0
        %295 = vmatpush1.bf16.xpose.msra.mxu0 0
        %296 = vmatprep.subr.bf16.mxu0 0
        %297 = vmatpush1.bf16.xpose.msra.mxu0 0
        %298 = vmatprep.mubr.bf16.mxu0 0
        %299 = vmatmul.mubr.bf16.gmra.mrb[0].mxu0 %v261
        %v300 = vpop.f32.mrb[0].mxu0
        %v301 = vadd.f32 0.0, %v300
        %v302 = vpop.f32.mrb[0].mxu0
        %v303 = vpop.f32.mrb[0].mxu0
        %v304 = vadd.f32 0.0, %v303
        %v305 = vpop.f32.mrb[0].mxu0
        %306 = vdwg.mxu0
        %308 = vrot.lane.b32.xlu0 %v253, 112
        %v309 = vpop.permute.xlu0 %308
        %v311 = vsel %vm259, %v253, 0
        %v314 = vsel %vm259, %v309, 0
        %316 = vmatprep.subr.bf16.mxu0 0
        %317 = vmatpush1.bf16.xpose.msra.mxu0 %v314
        %318 = vmatprep.subr.bf16.mxu0 0
        %319 = vmatpush1.bf16.xpose.msra.mxu0 0
        %320 = vmatprep.subr.bf16.mxu0 0
        %321 = vmatpush1.bf16.xpose.msra.mxu0 0
        %322 = vmatprep.subr.bf16.mxu0 0
        %323 = vmatpush1.bf16.xpose.msra.mxu0 0
        %324 = vmatprep.subr.bf16.mxu0 0
        %325 = vmatpush1.bf16.xpose.msra.mxu0 0
        %326 = vmatprep.subr.bf16.mxu0 0
        %327 = vmatpush1.bf16.xpose.msra.mxu0 0
        %328 = vmatprep.subr.bf16.mxu0 0
        %329 = vmatpush1.bf16.xpose.msra.mxu0 0
        %330 = vmatprep.subr.bf16.mxu0 0
        %331 = vmatpush1.bf16.xpose.msra.mxu0 0
        %332 = vmatprep.subr.bf16.mxu0 0
        %333 = vmatpush1.bf16.xpose.msra.mxu0 0
        %334 = vmatprep.subr.bf16.mxu0 0
        %335 = vmatpush1.bf16.xpose.msra.mxu0 0
        %336 = vmatprep.subr.bf16.mxu0 0
        %337 = vmatpush1.bf16.xpose.msra.mxu0 0
        %338 = vmatprep.subr.bf16.mxu0 0
        %339 = vmatpush1.bf16.xpose.msra.mxu0 0
        %340 = vmatprep.subr.bf16.mxu0 0
        %341 = vmatpush1.bf16.xpose.msra.mxu0 0
        %342 = vmatprep.subr.bf16.mxu0 0
        %343 = vmatpush1.bf16.xpose.msra.mxu0 0
        %344 = vmatprep.subr.bf16.mxu0 0
        %345 = vmatpush1.bf16.xpose.msra.mxu0 0
        %346 = vmatprep.subr.bf16.mxu0 0
        %347 = vmatpush1.bf16.xpose.msra.mxu0 0
        %348 = vmatprep.mubr.bf16.mxu0 0
        %349 = vmatmul.mubr.bf16.gmra.mrb[0].mxu0 %v311
        %v350 = vpop.f32.mrb[0].mxu0
        %v351 = vadd.f32 0.0, %v350
        %v352 = vpop.f32.mrb[0].mxu0
        %v353 = vpop.f32.mrb[0].mxu0
        %v354 = vadd.f32 0.0, %v353
        %v355 = vpop.f32.mrb[0].mxu0
        %356 = vdwg.mxu0
        %358 = vrot.lane.b32.xlu0 %v254, 112
        %v359 = vpop.permute.xlu0 %358
        %v361 = vsel %vm259, %v254, 0
        %v364 = vsel %vm259, %v359, 0
        %366 = vmatprep.subr.bf16.mxu0 0
        %367 = vmatpush1.bf16.xpose.msra.mxu0 %v364
        %368 = vmatprep.subr.bf16.mxu0 0
        %369 = vmatpush1.bf16.xpose.msra.mxu0 0
        %370 = vmatprep.subr.bf16.mxu0 0
        %371 = vmatpush1.bf16.xpose.msra.mxu0 0
        %372 = vmatprep.subr.bf16.mxu0 0
        %373 = vmatpush1.bf16.xpose.msra.mxu0 0
        %374 = vmatprep.subr.bf16.mxu0 0
        %375 = vmatpush1.bf16.xpose.msra.mxu0 0
        %376 = vmatprep.subr.bf16.mxu0 0
        %377 = vmatpush1.bf16.xpose.msra.mxu0 0
        %378 = vmatprep.subr.bf16.mxu0 0
        %379 = vmatpush1.bf16.xpose.msra.mxu0 0
        %380 = vmatprep.subr.bf16.mxu0 0
        %381 = vmatpush1.bf16.xpose.msra.mxu0 0
        %382 = vmatprep.subr.bf16.mxu0 0
        %383 = vmatpush1.bf16.xpose.msra.mxu0 0
        %384 = vmatprep.subr.bf16.mxu0 0
        %385 = vmatpush1.bf16.xpose.msra.mxu0 0
        %386 = vmatprep.subr.bf16.mxu0 0
        %387 = vmatpush1.bf16.xpose.msra.mxu0 0
        %388 = vmatprep.subr.bf16.mxu0 0
        %389 = vmatpush1.bf16.xpose.msra.mxu0 0
        %390 = vmatprep.subr.bf16.mxu0 0
        %391 = vmatpush1.bf16.xpose.msra.mxu0 0
        %392 = vmatprep.subr.bf16.mxu0 0
        %393 = vmatpush1.bf16.xpose.msra.mxu0 0
        %394 = vmatprep.subr.bf16.mxu0 0
        %395 = vmatpush1.bf16.xpose.msra.mxu0 0
        %396 = vmatprep.subr.bf16.mxu0 0
        %397 = vmatpush1.bf16.xpose.msra.mxu0 0
        %398 = vmatprep.mubr.bf16.mxu0 0
        %399 = vmatmul.mubr.bf16.gmra.mrb[0].mxu0 %v361
        %v400 = vpop.f32.mrb[0].mxu0
        %v401 = vadd.f32 0.0, %v400
        %v402 = vpop.f32.mrb[0].mxu0
        %v403 = vpop.f32.mrb[0].mxu0
        %v404 = vadd.f32 0.0, %v403
        %v405 = vpop.f32.mrb[0].mxu0
        %406 = vdwg.mxu0
        %408 = vrot.lane.b32.xlu0 %v255, 112
        %v409 = vpop.permute.xlu0 %408
        %v411 = vsel %vm259, %v255, 0
        %v414 = vsel %vm259, %v409, 0
        %416 = vmatprep.subr.bf16.mxu0 0
        %417 = vmatpush1.bf16.xpose.msra.mxu0 %v414
        %418 = vmatprep.subr.bf16.mxu0 0
        %419 = vmatpush1.bf16.xpose.msra.mxu0 0
        %420 = vmatprep.subr.bf16.mxu0 0
        %421 = vmatpush1.bf16.xpose.msra.mxu0 0
        %422 = vmatprep.subr.bf16.mxu0 0
        %423 = vmatpush1.bf16.xpose.msra.mxu0 0
        %424 = vmatprep.subr.bf16.mxu0 0
        %425 = vmatpush1.bf16.xpose.msra.mxu0 0
        %426 = vmatprep.subr.bf16.mxu0 0
        %427 = vmatpush1.bf16.xpose.msra.mxu0 0
        %428 = vmatprep.subr.bf16.mxu0 0
        %429 = vmatpush1.bf16.xpose.msra.mxu0 0
        %430 = vmatprep.subr.bf16.mxu0 0
        %431 = vmatpush1.bf16.xpose.msra.mxu0 0
        %432 = vmatprep.subr.bf16.mxu0 0
        %433 = vmatpush1.bf16.xpose.msra.mxu0 0
        %434 = vmatprep.subr.bf16.mxu0 0
        %435 = vmatpush1.bf16.xpose.msra.mxu0 0
        %436 = vmatprep.subr.bf16.mxu0 0
        %437 = vmatpush1.bf16.xpose.msra.mxu0 0
        %438 = vmatprep.subr.bf16.mxu0 0
        %439 = vmatpush1.bf16.xpose.msra.mxu0 0
        %440 = vmatprep.subr.bf16.mxu0 0
        %441 = vmatpush1.bf16.xpose.msra.mxu0 0
        %442 = vmatprep.subr.bf16.mxu0 0
        %443 = vmatpush1.bf16.xpose.msra.mxu0 0
        %444 = vmatprep.subr.bf16.mxu0 0
        %445 = vmatpush1.bf16.xpose.msra.mxu0 0
        %446 = vmatprep.subr.bf16.mxu0 0
        %447 = vmatpush1.bf16.xpose.msra.mxu0 0
        %448 = vmatprep.mubr.bf16.mxu0 0
        %449 = vmatmul.mubr.bf16.gmra.mrb[0].mxu0 %v411
        %v450 = vpop.f32.mrb[0].mxu0
        %v451 = vadd.f32 0.0, %v450
        %v452 = vpop.f32.mrb[0].mxu0
        %v453 = vpop.f32.mrb[0].mxu0
        %v454 = vadd.f32 0.0, %v453
        %v455 = vpop.f32.mrb[0].mxu0
        %456 = vdwg.mxu0
        %v457 = vsel %vm259, %v301, -inf
        %458 = vmax.xlane.f32.xlu0 %v457
        %v459 = vpop.xlane.xlu0 %458
        %v460 = vsel %vm259, %v304, -inf
        %461 = vmax.xlane.f32.xlu0 %v460
        %v462 = vpop.xlane.xlu0 %461
        %v463 = vsel %vm259, %v351, -inf
        %464 = vmax.xlane.f32.xlu0 %v463
        %v465 = vpop.xlane.xlu0 %464
        %v466 = vsel %vm259, %v354, -inf
        %467 = vmax.xlane.f32.xlu0 %v466
        %v468 = vpop.xlane.xlu0 %467
        %v469 = vsel %vm259, %v401, -inf
        %470 = vmax.xlane.f32.xlu0 %v469
        %v471 = vpop.xlane.xlu0 %470
        %v472 = vsel %vm259, %v404, -inf
        %473 = vmax.xlane.f32.xlu0 %v472
        %v474 = vpop.xlane.xlu0 %473
        %v475 = vsel %vm259, %v451, -inf
        %476 = vmax.xlane.f32.xlu0 %v475
        %v477 = vpop.xlane.xlu0 %476
        %v478 = vsel %vm259, %v454, -inf
        %479 = vmax.xlane.f32.xlu0 %v478
        %v480 = vpop.xlane.xlu0 %479
        %v481 = vsub.f32 %v301, %v459
        %v482 = vsub.f32 %v304, %v462
        %v483 = vsub.f32 %v351, %v465
        %v484 = vsub.f32 %v354, %v468
        %v485 = vsub.f32 %v401, %v471
        %v486 = vsub.f32 %v404, %v474
        %v487 = vsub.f32 %v451, %v477
        %v488 = vsub.f32 %v454, %v480
        %v489 = vmul.f32 %v481, 1.442695
        %v490 = vpow.pop %v489
        %v491 = vmul.f32 %v482, 1.442695
        %v492 = vpow.pop %v491
        %v493 = vmul.f32 %v483, 1.442695
        %v494 = vpow.pop %v493
        %v495 = vmul.f32 %v484, 1.442695
        %v496 = vpow.pop %v495
        %v497 = vmul.f32 %v485, 1.442695
        %v498 = vpow.pop %v497
        %v499 = vmul.f32 %v486, 1.442695
        %v500 = vpow.pop %v499
        %v501 = vmul.f32 %v487, 1.442695
        %v502 = vpow.pop %v501
        %v503 = vmul.f32 %v488, 1.442695
        %v504 = vpow.pop %v503
        %v505 = vsel %vm259, %v490, 0.0
        %506 = vadd.xlane.f32.xlu0 %v505
        %v507 = vpop.xlane.xlu0 %506
        %v508 = vsel %vm259, %v492, 0.0
        %509 = vadd.xlane.f32.xlu0 %v508
        %v510 = vpop.xlane.xlu0 %509
        %v511 = vsel %vm259, %v494, 0.0
        %512 = vadd.xlane.f32.xlu0 %v511
        %v513 = vpop.xlane.xlu0 %512
        %v514 = vsel %vm259, %v496, 0.0
        %515 = vadd.xlane.f32.xlu0 %v514
        %v516 = vpop.xlane.xlu0 %515
        %v517 = vsel %vm259, %v498, 0.0
        %518 = vadd.xlane.f32.xlu0 %v517
        %v519 = vpop.xlane.xlu0 %518
        %v520 = vsel %vm259, %v500, 0.0
        %521 = vadd.xlane.f32.xlu0 %v520
        %v522 = vpop.xlane.xlu0 %521
        %v523 = vsel %vm259, %v502, 0.0
        %524 = vadd.xlane.f32.xlu0 %v523
        %v525 = vpop.xlane.xlu0 %524
        %v526 = vsel %vm259, %v504, 0.0
        %527 = vadd.xlane.f32.xlu0 %v526
        %v528 = vpop.xlane.xlu0 %527
        %v529 = vrcp.pop %v507
        %v530 = vrcp.pop %v510
        %v531 = vrcp.pop %v513
        %v532 = vrcp.pop %v516
        %v533 = vrcp.pop %v519
        %v534 = vrcp.pop %v522
        %v535 = vrcp.pop %v525
        %v536 = vrcp.pop %v528
        %v537 = vmul.f32 %v490, %v529
        %v538 = vmul.f32 %v492, %v530
        %v539 = vmul.f32 %v494, %v531
        %v540 = vmul.f32 %v496, %v532
        %v541 = vmul.f32 %v498, %v533
        %v542 = vmul.f32 %v500, %v534
        %v543 = vmul.f32 %v502, %v535
        %v544 = vmul.f32 %v504, %v536
        %545 = vst.msk [vmem:[%s137] sm:$0xff] %vm259, %v537
        %546 = vst.msk [vmem:[%s137 + $0x8] sm:$0xff] %vm259, %v538
        %547 = vst.msk [vmem:[%s137 + $0x10] sm:$0xff] %vm259, %v539
        %548 = vst.msk [vmem:[%s137 + $0x18] sm:$0xff] %vm259, %v540
        %549 = vst.msk [vmem:[%s137 + $0x20] sm:$0xff] %vm259, %v541
        %550 = vst.msk [vmem:[%s137 + $0x28] sm:$0xff] %vm259, %v542
        %551 = vst.msk [vmem:[%s137 + $0x30] sm:$0xff] %vm259, %v543
        %552 = vst.msk [vmem:[%s137 + $0x38] sm:$0xff] %vm259, %v544
        %s553 = sand.u32 %s71, 1
        %s554 = scalar_lea.sflag [#allocation3], %s553
        %s555 = sand.u32 %s71, 1
        %s556 = smul.addr %s555, 64
        %s557 = scalar_lea.vmem [#allocation2], %s556
        // Predicated region
        $region29: #{tpu_custom_call.1} parent=27 // pred_check
          %p558 = pneg %p81
        $region30: #{tpu_custom_call.1} parent=27 // pred_check_branch
          %560 = sbr.rel (%p558) target = $region32
        $region31: #{tpu_custom_call.1} parent=27 // pred_region
          %s561 = smul.u32 4, %s16
          %s563 = ssub.s32 1024, 1024
          %564 = vsyncadd %s554, %s563
          %s565 = smul.addr %s561, 2
          %s566 = smul.addr %s565, 128
          %s567 = scalar_lea.hbm %s2, %s566
          %s568 = sshll.u32 %s557, 4
          %s569 = int_to_ptr.vmem [resolvable:$true] %s568
          %574 = dma.vmem_to_hbm [thread:$0]  %s569, 1024, %s567, %s554, 128, 128, 8
        $region32: #{tpu_custom_call.1} parent=27 // pred_fallthru
          _
      $region28: #{tpu_custom_call.1} parent=5 // pred_fallthru
        _
      %p575 = scmp.le.s32.totalorder 2, %s11
      // Predicated region
      $region33: #{tpu_custom_call.1} parent=5 // pred_check
        %p576 = pneg %p575
      $region34: #{tpu_custom_call.1} parent=5 // pred_check_branch
        %578 = sbr.rel (%p576) target = $region36
      $region35: #{tpu_custom_call.1} parent=5 // pred_region
        %s579 = ssub.s32 %s11, 2
        // Predicated region
        $region37: #{tpu_custom_call.1} parent=35 // pred_check
          %p580 = pneg %p87
        $region38: #{tpu_custom_call.1} parent=35 // pred_check_branch
          %582 = sbr.rel (%p580) target = $region40
        $region39: #{tpu_custom_call.1} parent=35 // pred_region
          %s583 = sand.u32 %s72, 1
          %s584 = scalar_lea.sflag [#allocation3], %s583
          %s585 = sand.u32 %s72, 1
          %s586 = smul.addr %s585, 64
          %s587 = scalar_lea.vmem [#allocation2], %s586
          %588 = dma.done %s584, 1024
        $region40: #{tpu_custom_call.1} parent=35 // pred_fallthru
          _
      $region36: #{tpu_custom_call.1} parent=5 // pred_fallthru
        _
    $region6: #{tpu_custom_call.1} parent=1 // loop_footer
      %s15 = sadd.s32 1, %s11
    $region7: #{tpu_custom_call.1} parent=1 // loop_footer_branch
      %10 = sbr.rel target = $region3
    $region8: #{tpu_custom_call.1} parent=1 // loop_exit
      _
    %589 = vsyncpa [#allocation3], 1
    %s590 = scalar_lea.sflag [#allocation3], 1
    %591 = vsyncpa %s590, 1

</llo_original>
